<compile_context>
chip_gen: v6e
topology: v6e:2x2x1
jax: 0.10.0
libtpu: 0.0.40
codegen_flags: <defaults>
</compile_context>

<pallas_src>
import jax
import jax.numpy as jnp
from jax.experimental import pallas as pl
from jax.experimental.pallas import tpu as pltpu


def critic_kernel(x_ref, w1_ref, b1_ref, w2_ref, b2_ref, w3_ref, b3_ref, o_ref):
    # Layer 1: (TB, D) @ (D, 256) + (1, 256) -> tanh        (MXU + VPU/EUP)
    h1 = jnp.tanh(
        jnp.dot(x_ref[...], w1_ref[...], preferred_element_type=jnp.float32)
        + b1_ref[...]
    )
    # Layer 2: (TB, 256) @ (256, 128) + (1, 128) -> tanh    (MXU + VPU/EUP)
    h2 = jnp.tanh(
        jnp.dot(h1, w2_ref[...], preferred_element_type=jnp.float32) + b2_ref[...]
    )
    # Layer 3 (value head, 128 -> 1).  Avoid an N=1 MXU matmul: transpose to
    # (128, TB) on the XLU, multiply by w3 (128, 1) broadcast across lanes on
    # the VPU, reduce over sublanes -> (1, TB) lane-dense value row.
    h2t = h2.T                                              # (128, TB)
    v = jnp.sum(h2t * w3_ref[...], axis=0, keepdims=True)   # (1, TB)
    v = v + b3_ref[0, 0]                                    # SMEM scalar bias
    o_ref[...] = v[None]                                    # (1, 1, TB) store


def critic_forward(state, params, *, batch_tile=128):
    """state: (B, D) float32.

    params: dict with w1 (D,256), b1 (1,256), w2 (256,128), b2 (1,128),
            w3 (128,1), b3 (1,1)  (w stored as (in, out), i.e. PyTorch W^T).
    Returns (B, 1) float32 values.
    """
    w1, b1 = params["w1"], params["b1"]
    w2, b2 = params["w2"], params["b2"]
    w3, b3 = params["w3"], params["b3"]
    B, D = state.shape

    # Batch tile: multiple of 8 (sublane granularity), capped at batch_tile.
    if B >= batch_tile:
        tb = batch_tile
    else:
        tb = max(8, ((B + 7) // 8) * 8)
    num_tiles = pl.cdiv(B, tb)
    b_pad = num_tiles * tb
    if b_pad != B:
        state = jnp.pad(state, ((0, b_pad - B), (0, 0)))

    # Constant index_map -> weight/bias blocks stay resident in VMEM.
    const2d = lambda a: pl.BlockSpec(a.shape, lambda i: (0, 0))

    out = pl.pallas_call(
        critic_kernel,
        out_shape=jax.ShapeDtypeStruct((num_tiles, 1, tb), jnp.float32),
        grid=(num_tiles,),
        in_specs=[
            pl.BlockSpec((tb, D), lambda i: (i, 0)),             # state tile
            const2d(w1), const2d(b1),
            const2d(w2), const2d(b2),
            const2d(w3),
            pl.BlockSpec(memory_space=pltpu.MemorySpace.SMEM),   # b3 scalar
        ],
        out_specs=pl.BlockSpec((1, 1, tb), lambda i: (i, 0, 0)),
        compiler_params=pltpu.CompilerParams(
            dimension_semantics=("parallel",),
        ),
    )(state, w1, b1, w2, b2, w3, b3)

    # Lane-dense (num_tiles, 1, tb) slab -> (B, 1) column (free reshape/slice).
    return out.reshape(-1)[:B].reshape(B, 1)


def init_critic_params(key, in_dim):
    """Deterministic init mimicking nn.Linear's U(-1/sqrt(fan_in), 1/sqrt(fan_in)).

    Weights are stored as (in, out) (PyTorch weight transposed) so the kernel
    computes x @ W + b directly on the MXU; w3 is (128, 1), b3 is (1, 1).
    """
    dims = [(in_dim, 256), (256, 128), (128, 1)]
    params = {}
    for i, (fan_in, fan_out) in enumerate(dims, start=1):
        key, kw, kb = jax.random.split(key, 3)
        bound = 1.0 / jnp.sqrt(jnp.float32(fan_in))
        params[f"w{i}"] = jax.random.uniform(
            kw, (fan_in, fan_out), jnp.float32, -bound, bound
        )
        params[f"b{i}"] = jax.random.uniform(
            kb, (1, fan_out), jnp.float32, -bound, bound
        )
    return params


def critic_reference(state, params):
    """Pure-JAX reference for correctness check."""
    v = jnp.tanh(state @ params["w1"] + params["b1"])
    v = jnp.tanh(v @ params["w2"] + params["b2"])
    return v @ params["w3"] + params["b3"]


if __name__ == "__main__":
    # Small shapes consistent with the module: the CyberBattle state space is a
    # flat float vector of size `linear_input_size` (here D=22).
    B, D = 8, 22

    key = jax.random.PRNGKey(0)
    k_params, k_x, k_x2 = jax.random.split(key, 3)
    params = init_critic_params(k_params, D)

    # Small batch (matches the single-state / small-batch PPO call pattern).
    state = jax.random.normal(k_x, (B, D), dtype=jnp.float32)
    out = jax.block_until_ready(critic_forward(state, params))
    ref = critic_reference(state, params)
    assert out.shape == (B, 1)
    assert jnp.allclose(out, ref, atol=1e-5, rtol=1e-5), "mismatch vs. reference (B=8)"

    # Larger, non-multiple-of-tile batch to exercise the tiled/padded grid path.
    B2 = 300
    state2 = jax.random.normal(k_x2, (B2, D), dtype=jnp.float32)
    out2 = jax.block_until_ready(critic_forward(state2, params, batch_tile=128))
    ref2 = critic_reference(state2, params)
    assert out2.shape == (B2, 1)
    assert jnp.allclose(out2, ref2, atol=1e-5, rtol=1e-5), "mismatch vs. reference (B=300)"

    print("KERNEL_OK")
</pallas_src>

<mosaic_0001>
module attributes {stable_mosaic.version = 11 : i64} {
  func.func @critic_kernel(%arg0: i32, %arg1: memref<8x22xf32, #tpu.memory_space<vmem>>, %arg2: memref<22x256xf32, #tpu.memory_space<vmem>>, %arg3: memref<1x256xf32, #tpu.memory_space<vmem>>, %arg4: memref<256x128xf32, #tpu.memory_space<vmem>>, %arg5: memref<1x128xf32, #tpu.memory_space<vmem>>, %arg6: memref<128x1xf32, #tpu.memory_space<vmem>>, %arg7: memref<1x1xf32, #tpu.memory_space<smem>>, %arg8: memref<1x1x8xf32, #tpu.memory_space<vmem>>) attributes {dimension_semantics = [#tpu.dimension_semantics<parallel>], iteration_bounds = array<i64: 1>, scalar_prefetch = 0 : i64, scratch_operands = 0 : i64, tpu.core_type = #tpu.core_type<tc>, window_params = [{transform_indices = @transform_0, window_bounds = array<i64: 8, 22>}, {pipeline_mode = #tpu.pipeline_mode<synchronous>, transform_indices = @transform_1, window_bounds = array<i64: 22, 256>}, {pipeline_mode = #tpu.pipeline_mode<synchronous>, transform_indices = @transform_2, window_bounds = array<i64: 1, 256>}, {pipeline_mode = #tpu.pipeline_mode<synchronous>, transform_indices = @transform_3, window_bounds = array<i64: 256, 128>}, {pipeline_mode = #tpu.pipeline_mode<synchronous>, transform_indices = @transform_4, window_bounds = array<i64: 1, 128>}, {pipeline_mode = #tpu.pipeline_mode<synchronous>, transform_indices = @transform_5, window_bounds = array<i64: 128, 1>}, {transform_indices = @transform_6, window_bounds = array<i64: 1, 1>}, {transform_indices = @transform_7, window_bounds = array<i64: 1, 1, 8>}]} {
    %c0 = arith.constant 0 : index
    %c0_0 = arith.constant 0 : index
    %0 = vector.load %arg1[%c0, %c0_0] : memref<8x22xf32, #tpu.memory_space<vmem>>, vector<8x22xf32>
    %c0_1 = arith.constant 0 : index
    %c0_2 = arith.constant 0 : index
    %1 = vector.load %arg2[%c0_1, %c0_2] : memref<22x256xf32, #tpu.memory_space<vmem>>, vector<22x256xf32>
    %cst = arith.constant dense<0.000000e+00> : vector<8x256xf32>
    %2 = tpu.matmul %0, %1, %cst {dimension_numbers = #tpu.dot_dimension_numbers<[1], [0], [0], [1], [0, 0, 1, 1], [], []>} : vector<8x22xf32>, vector<22x256xf32>, vector<8x256xf32> -> vector<8x256xf32>
    %c0_3 = arith.constant 0 : index
    %c0_4 = arith.constant 0 : index
    %3 = vector.load %arg3[%c0_3, %c0_4] : memref<1x256xf32, #tpu.memory_space<vmem>>, vector<1x256xf32>
    %4 = vector.broadcast %3 : vector<1x256xf32> to vector<8x256xf32>
    %5 = arith.addf %2, %4 : vector<8x256xf32>
    %6 = math.tanh %5 : vector<8x256xf32>
    %c0_5 = arith.constant 0 : index
    %c0_6 = arith.constant 0 : index
    %7 = vector.load %arg4[%c0_5, %c0_6] : memref<256x128xf32, #tpu.memory_space<vmem>>, vector<256x128xf32>
    %cst_7 = arith.constant dense<0.000000e+00> : vector<8x128xf32>
    %8 = tpu.matmul %6, %7, %cst_7 {dimension_numbers = #tpu.dot_dimension_numbers<[1], [0], [0], [1], [0, 0, 1, 1], [], []>} : vector<8x256xf32>, vector<256x128xf32>, vector<8x128xf32> -> vector<8x128xf32>
    %c0_8 = arith.constant 0 : index
    %c0_9 = arith.constant 0 : index
    %9 = vector.load %arg5[%c0_8, %c0_9] : memref<1x128xf32, #tpu.memory_space<vmem>>, vector<1x128xf32>
    %10 = vector.broadcast %9 : vector<1x128xf32> to vector<8x128xf32>
    %11 = arith.addf %8, %10 : vector<8x128xf32>
    %12 = math.tanh %11 : vector<8x128xf32>
    %13 = tpu.transpose %12, [1, 0] : vector<8x128xf32> -> vector<128x8xf32>
    %c0_10 = arith.constant 0 : index
    %c0_11 = arith.constant 0 : index
    %14 = vector.load %arg6[%c0_10, %c0_11] : memref<128x1xf32, #tpu.memory_space<vmem>>, vector<128x1xf32>
    %15 = vector.broadcast %14 : vector<128x1xf32> to vector<128x8xf32>
    %16 = arith.mulf %13, %15 : vector<128x8xf32>
    %cst_12 = arith.constant dense<0.000000e+00> : vector<8xf32>
    %17 = vector.multi_reduction <add>, %16, %cst_12 [0] : vector<128x8xf32> to vector<8xf32>
    %18 = vector.shape_cast %17 : vector<8xf32> to vector<1x8xf32>
    %c0_13 = arith.constant 0 : index
    %c0_14 = arith.constant 0 : index
    %19 = memref.load %arg7[%c0_13, %c0_14] : memref<1x1xf32, #tpu.memory_space<smem>>
    %20 = vector.broadcast %19 : f32 to vector<1x8xf32>
    %21 = arith.addf %18, %20 : vector<1x8xf32>
    %22 = vector.shape_cast %21 : vector<1x8xf32> to vector<1x1x8xf32>
    %c0_15 = arith.constant 0 : index
    %c0_16 = arith.constant 0 : index
    %c0_17 = arith.constant 0 : index
    %23 = vector.load %arg8[%c0_15, %c0_16, %c0_17] : memref<1x1x8xf32, #tpu.memory_space<vmem>>, vector<1x1x8xf32>
    tpu.vector_store %arg8[%c0_15, %c0_16, %c0_17], %22 {strides = array<i32>} : memref<1x1x8xf32, #tpu.memory_space<vmem>>, vector<1x1x8xf32>,
    return
  }
  func.func @transform_0(%arg0: i32) -> (i32, i32) {
    %c0_i32 = arith.constant 0 : i32
    %c0_i32_0 = arith.constant 0 : i32
    return %arg0, %c0_i32 : i32, i32
  }
  func.func @transform_1(%arg0: i32) -> (i32, i32) {
    %c0_i32 = arith.constant 0 : i32
    %c0_i32_0 = arith.constant 0 : i32
    %c0_i32_1 = arith.constant 0 : i32
    return %c0_i32, %c0_i32_0 : i32, i32
  }
  func.func @transform_2(%arg0: i32) -> (i32, i32) {
    %c0_i32 = arith.constant 0 : i32
    %c0_i32_0 = arith.constant 0 : i32
    %c0_i32_1 = arith.constant 0 : i32
    return %c0_i32, %c0_i32_0 : i32, i32
  }
  func.func @transform_3(%arg0: i32) -> (i32, i32) {
    %c0_i32 = arith.constant 0 : i32
    %c0_i32_0 = arith.constant 0 : i32
    %c0_i32_1 = arith.constant 0 : i32
    return %c0_i32, %c0_i32_0 : i32, i32
  }
  func.func @transform_4(%arg0: i32) -> (i32, i32) {
    %c0_i32 = arith.constant 0 : i32
    %c0_i32_0 = arith.constant 0 : i32
    %c0_i32_1 = arith.constant 0 : i32
    return %c0_i32, %c0_i32_0 : i32, i32
  }
  func.func @transform_5(%arg0: i32) -> (i32, i32) {
    %c0_i32 = arith.constant 0 : i32
    %c0_i32_0 = arith.constant 0 : i32
    %c0_i32_1 = arith.constant 0 : i32
    return %c0_i32, %c0_i32_0 : i32, i32
  }
  func.func @transform_6(%arg0: i32) -> (i32, i32) {
    %c0_i32 = arith.constant 0 : i32
    %c0_i32_0 = arith.constant 0 : i32
    %c0_i32_1 = arith.constant 0 : i32
    return %c0_i32, %c0_i32_0 : i32, i32
  }
  func.func @transform_7(%arg0: i32) -> (i32, i32, i32) {
    %c0_i32 = arith.constant 0 : i32
    %c0_i32_0 = arith.constant 0 : i32
    %c0_i32_1 = arith.constant 0 : i32
    return %arg0, %c0_i32, %c0_i32_0 : i32, i32, i32
  }
}

</mosaic_0001>

<llo_original>
// kernel: tpu_custom_call.1
$region0: #{tpu_custom_call.1}
  #allocation0 [shape = 'u32[]', space=smem, size = 0x4, offset = 0x4, fixed_abs, tag = 'smem constant byte address 0x4 - core index']
  #allocation1 [shape = 'u32[144,128]{1,0:T(1,128)}', space=vmem, size = 0x12000, scoped, tag = 'internal scratch']
  #allocation2 [shape = 'f32[1,1]{1,0:T(1,128)S(6)}', space=smem, size = 0x200, scoped, tag = 'scoped memory for tpu_custom_call.1']
  %s0 = inlined_call_operand.vmem [shape: f32[8,22], index: 0, kind: input, shape index: {}]
  %s1 = inlined_call_operand.vmem [shape: f32[22,256], index: 1, kind: input, shape index: {}]
  %s2 = inlined_call_operand.vmem [shape: f32[1,256], index: 2, kind: input, shape index: {}]
  %s3 = inlined_call_operand.hbm [shape: f32[256,128], index: 3, kind: input, shape index: {}]
  %s4 = inlined_call_operand.vmem [shape: f32[1,128], index: 4, kind: input, shape index: {}]
  %s5 = inlined_call_operand.vmem [shape: f32[128,1], index: 5, kind: input, shape index: {}]
  %s6 = inlined_call_operand.<no memory space> [shape: f32[1,1], index: 6, kind: input, shape index: {}]
  %s7 = inlined_call_operand.hbm [shape: f32[1,1,8], index: 7, kind: output, shape index: {}]
  %s8 = sld [smem:[#allocation0]]
  $region42: #{tpu_custom_call.1} parent=0
    _
  %s10 = ssub.s32 1, %s8
  %s11 = scalar_select 0, %s10, %s8
  %12 = sst [smem:[#allocation2]] %s6
  $region1: #{tpu_custom_call.1} parent=0
    #allocation3 [shape = 'u8[131072]{0}', space=vmem, size = 0x20000, scoped, tag = 'input window, operand 3, single buffered']
    #allocation4 [shape = 's32[1]{0}', space=sflag, size = 0x4, scoped, tag = 'scoped memory for tpu_custom_call.1']
    #allocation5 [shape = 's32[1]{0}', space=sflag, size = 0x4, scoped, tag = 'scoped memory for tpu_custom_call.1']
    #allocation6 [shape = 'u8[512]{0}', space=vmem, size = 0x400, scoped, tag = 'output window, operand 0, single buffered']
    %13 = vsyncpa [#allocation4], 0
    %14 = vsyncpa [#allocation5], 0
    // Predicated region
    $region2: #{tpu_custom_call.1} parent=1 // pred_check
      _
    $region3: #{tpu_custom_call.1} parent=1 // pred_check_branch
      %16 = sbr.rel (0) target = $region5
    $region4: #{tpu_custom_call.1} parent=1 // pred_region
      _
    $region5: #{tpu_custom_call.1} parent=1 // pred_fallthru
      _
    // Predicated region
    $region6: #{tpu_custom_call.1} parent=1 // pred_check
      _
    $region7: #{tpu_custom_call.1} parent=1 // pred_check_branch
      %18 = sbr.rel (0) target = $region9
    $region8: #{tpu_custom_call.1} parent=1 // pred_region
      _
    $region9: #{tpu_custom_call.1} parent=1 // pred_fallthru
      _
    // Predicated region
    $region10: #{tpu_custom_call.1} parent=1 // pred_check
      _
    $region11: #{tpu_custom_call.1} parent=1 // pred_check_branch
      %20 = sbr.rel (0) target = $region13
    $region12: #{tpu_custom_call.1} parent=1 // pred_region
      _
    $region13: #{tpu_custom_call.1} parent=1 // pred_fallthru
      _
    // Predicated region
    $region14: #{tpu_custom_call.1} parent=1 // pred_check
      _
    $region15: #{tpu_custom_call.1} parent=1 // pred_check_branch
      %22 = sbr.rel (0) target = $region17
    $region16: #{tpu_custom_call.1} parent=1 // pred_region
      %s24 = ssub.s32 4096, 4096
      %25 = vsyncadd [#allocation4], %s24
      %s26 = sshll.u32 [#allocation3], 4
      %s27 = int_to_ptr.vmem [resolvable:$true] %s26
      %32 = dma.hbm_to_vmem [thread:$0]  %s3, 4096, %s27, [#allocation4], 128, 128, 8
    $region17: #{tpu_custom_call.1} parent=1 // pred_fallthru
      _
    // Predicated region
    $region18: #{tpu_custom_call.1} parent=1 // pred_check
      _
    $region19: #{tpu_custom_call.1} parent=1 // pred_check_branch
      %34 = sbr.rel (0) target = $region21
    $region20: #{tpu_custom_call.1} parent=1 // pred_region
      _
    $region21: #{tpu_custom_call.1} parent=1 // pred_fallthru
      _
    // Predicated region
    $region22: #{tpu_custom_call.1} parent=1 // pred_check
      _
    $region23: #{tpu_custom_call.1} parent=1 // pred_check_branch
      %36 = sbr.rel (0) target = $region25
    $region24: #{tpu_custom_call.1} parent=1 // pred_region
      _
    $region25: #{tpu_custom_call.1} parent=1 // pred_fallthru
      _
    // Predicated region
    $region26: #{tpu_custom_call.1} parent=1 // pred_check
      _
    $region27: #{tpu_custom_call.1} parent=1 // pred_check_branch
      %38 = sbr.rel (0) target = $region29
    $region28: #{tpu_custom_call.1} parent=1 // pred_region
      _
    $region29: #{tpu_custom_call.1} parent=1 // pred_fallthru
      _
    // Predicated region
    $region30: #{tpu_custom_call.1} parent=1 // pred_check
      _
    $region31: #{tpu_custom_call.1} parent=1 // pred_check_branch
      %40 = sbr.rel (0) target = $region33
    $region32: #{tpu_custom_call.1} parent=1 // pred_region
      %41 = dma.done [#allocation4], 4096
    $region33: #{tpu_custom_call.1} parent=1 // pred_fallthru
      _
    %v42 = vld [vmem:[%s0] sm:$0xff]
    %v43 = vld [vmem:[%s1] sm:$0xff]
    %v44 = vld [vmem:[%s1 + $0x8] sm:$0xff]
    %v45 = vld [vmem:[%s1 + $0x10] sm:$0xff]
    %v46 = vld [vmem:[%s1 + $0x18] sm:$0xff]
    %v47 = vld [vmem:[%s1 + $0x20] sm:$0x3f]
    %v48 = vld [vmem:[%s1 + $0x28] sm:$0x3f]
    %v49 = vld [vmem:[%s2] sm:$0x3]
    %v51 = vlaneseq
    %v52 = vshrl.u32 %v51, 7
    %v53 = vsub.s32 0, %v52
    %v54 = vrot.slane %v49, %v53
    %v55 = vlaneseq
    %v56 = vshrl.u32 %v55, 7
    %v57 = vsub.s32 1, %v56
    %v58 = vrot.slane %v49, %v57
    %vm61 = vcmask 179200
    %v63 = vsel %vm61, %v42, 0
    %vm65 = vcmask 1045504
    %v67 = vsel %vm65, %v47, 0
    %v70 = vsel %vm65, %v48, 0
    %72 = vmatprep.subr.mxu0 0.0
    %73 = vmatpush1.msra.mxu0 0.0
    %74 = vmatprep.subr.mxu0 0.0
    %75 = vmatpush1.msra.mxu0 0.0
    %76 = vmatprep.subr.mxu0 0.0
    %77 = vmatpush1.msra.mxu0 0.0
    %78 = vmatprep.subr.mxu0 0.0
    %79 = vmatpush1.msra.mxu0 0.0
    %80 = vmatprep.subr.mxu0 0.0
    %81 = vmatpush1.msra.mxu0 0.0
    %82 = vmatprep.subr.mxu0 0.0
    %83 = vmatpush1.msra.mxu0 0.0
    %84 = vmatprep.subr.mxu0 0.0
    %85 = vmatpush1.msra.mxu0 0.0
    %86 = vmatprep.subr.mxu0 0.0
    %87 = vmatpush1.msra.mxu0 0.0
    %88 = vmatprep.subr.mxu0 0.0
    %89 = vmatpush1.msra.mxu0 0.0
    %90 = vmatprep.subr.mxu0 0.0
    %91 = vmatpush1.msra.mxu0 0.0
    %92 = vmatprep.subr.mxu0 0.0
    %93 = vmatpush1.msra.mxu0 0.0
    %94 = vmatprep.subr.mxu0 0.0
    %95 = vmatpush1.msra.mxu0 0.0
    %96 = vmatprep.subr.mxu0 0.0
    %97 = vmatpush1.msra.mxu0 0.0
    %98 = vmatprep.subr.mxu0 %v70
    %99 = vmatpush1.msra.mxu0 %v67
    %100 = vmatprep.subr.mxu0 %v46
    %101 = vmatpush1.msra.mxu0 %v45
    %102 = vmatprep.subr.mxu0 %v44
    %103 = vmatpush1.msra.mxu0 %v43
    %104 = vmatprep.subr.mxu0 0.0
    %105 = vmatpush2.msra.mxu0 0.0
    %106 = vmatprep.subr.mxu0 0.0
    %107 = vmatpush2.msra.mxu0 0.0
    %108 = vmatprep.subr.mxu0 0.0
    %109 = vmatpush2.msra.mxu0 0.0
    %110 = vmatprep.subr.mxu0 0.0
    %111 = vmatpush2.msra.mxu0 0.0
    %112 = vmatprep.subr.mxu0 0.0
    %113 = vmatpush2.msra.mxu0 0.0
    %114 = vmatprep.subr.mxu0 0.0
    %115 = vmatpush2.msra.mxu0 0.0
    %116 = vmatprep.subr.mxu0 0.0
    %117 = vmatpush2.msra.mxu0 0.0
    %118 = vmatprep.subr.mxu0 0.0
    %119 = vmatpush2.msra.mxu0 0.0
    %120 = vmatprep.subr.mxu0 0.0
    %121 = vmatpush2.msra.mxu0 0.0
    %122 = vmatprep.subr.mxu0 0.0
    %123 = vmatpush2.msra.mxu0 0.0
    %124 = vmatprep.subr.mxu0 0.0
    %125 = vmatpush2.msra.mxu0 0.0
    %126 = vmatprep.subr.mxu0 0.0
    %127 = vmatpush2.msra.mxu0 0.0
    %128 = vmatprep.subr.mxu0 0.0
    %129 = vmatpush2.msra.mxu0 0.0
    %130 = vmatprep.subr.mxu0 0.0
    %131 = vmatpush2.msra.mxu0 0.0
    %132 = vmatprep.subr.mxu0 0.0
    %133 = vmatpush2.msra.mxu0 0.0
    %134 = vmatprep.subr.mxu0 0.0
    %135 = vmatpush2.msra.mxu0 0.0
    %136 = vmatprep.mubr.f32.mxu0 0.0
    %137 = vmatmul.mubr.f32.gmra.mxu0 %v63
    %v138 = vpop.f32.mrf.mxu0
    %v139 = vadd.f32 %v54, %v138
    %v140 = vpop.f32.mrf.mxu0
    %v141 = vadd.f32 %v58, %v140
    %142 = vdwg.mxu0
    %v143 = vtanh.pop %v139
    %v144 = vtanh.pop %v141
    %v145 = vld [vmem:[#allocation3] sm:$0xff]
    %v146 = vld [vmem:[#allocation3 + $0x8] sm:$0xff]
    %v147 = vld [vmem:[#allocation3 + $0x10] sm:$0xff]
    %v148 = vld [vmem:[#allocation3 + $0x18] sm:$0xff]
    %v149 = vld [vmem:[#allocation3 + $0x20] sm:$0xff]
    %v150 = vld [vmem:[#allocation3 + $0x28] sm:$0xff]
    %v151 = vld [vmem:[#allocation3 + $0x30] sm:$0xff]
    %v152 = vld [vmem:[#allocation3 + $0x38] sm:$0xff]
    %v153 = vld [vmem:[#allocation3 + $0x40] sm:$0xff]
    %v154 = vld [vmem:[#allocation3 + $0x48] sm:$0xff]
    %v155 = vld [vmem:[#allocation3 + $0x50] sm:$0xff]
    %v156 = vld [vmem:[#allocation3 + $0x58] sm:$0xff]
    %v157 = vld [vmem:[#allocation3 + $0x60] sm:$0xff]
    %v158 = vld [vmem:[#allocation3 + $0x68] sm:$0xff]
    %v159 = vld [vmem:[#allocation3 + $0x70] sm:$0xff]
    %v160 = vld [vmem:[#allocation3 + $0x78] sm:$0xff]
    %v161 = vld [vmem:[#allocation3 + $0x80] sm:$0xff]
    %v162 = vld [vmem:[#allocation3 + $0x88] sm:$0xff]
    %v163 = vld [vmem:[#allocation3 + $0x90] sm:$0xff]
    %v164 = vld [vmem:[#allocation3 + $0x98] sm:$0xff]
    %v165 = vld [vmem:[#allocation3 + $0xa0] sm:$0xff]
    %v166 = vld [vmem:[#allocation3 + $0xa8] sm:$0xff]
    %v167 = vld [vmem:[#allocation3 + $0xb0] sm:$0xff]
    %v168 = vld [vmem:[#allocation3 + $0xb8] sm:$0xff]
    %v169 = vld [vmem:[#allocation3 + $0xc0] sm:$0xff]
    %v170 = vld [vmem:[#allocation3 + $0xc8] sm:$0xff]
    %v171 = vld [vmem:[#allocation3 + $0xd0] sm:$0xff]
    %v172 = vld [vmem:[#allocation3 + $0xd8] sm:$0xff]
    %v173 = vld [vmem:[#allocation3 + $0xe0] sm:$0xff]
    %v174 = vld [vmem:[#allocation3 + $0xe8] sm:$0xff]
    %v175 = vld [vmem:[#allocation3 + $0xf0] sm:$0xff]
    %v176 = vld [vmem:[#allocation3 + $0xf8] sm:$0xff]
    %v177 = vld [vmem:[%s4] sm:$0x1]
    %v179 = vlaneseq
    %v180 = vshrl.u32 %v179, 7
    %v181 = vsub.s32 0, %v180
    %v182 = vrot.slane %v177, %v181
    %184 = vmatprep.subr.mxu0 0.0
    %185 = vmatpush1.msra.mxu0 %v160
    %186 = vmatprep.subr.mxu0 0.0
    %187 = vmatpush1.msra.mxu0 %v159
    %188 = vmatprep.subr.mxu0 0.0
    %189 = vmatpush1.msra.mxu0 %v158
    %190 = vmatprep.subr.mxu0 0.0
    %191 = vmatpush1.msra.mxu0 %v157
    %192 = vmatprep.subr.mxu0 0.0
    %193 = vmatpush1.msra.mxu0 %v156
    %194 = vmatprep.subr.mxu0 0.0
    %195 = vmatpush1.msra.mxu0 %v155
    %196 = vmatprep.subr.mxu0 0.0
    %197 = vmatpush1.msra.mxu0 %v154
    %198 = vmatprep.subr.mxu0 0.0
    %199 = vmatpush1.msra.mxu0 %v153
    %200 = vmatprep.subr.mxu0 0.0
    %201 = vmatpush1.msra.mxu0 %v152
    %202 = vmatprep.subr.mxu0 0.0
    %203 = vmatpush1.msra.mxu0 %v151
    %204 = vmatprep.subr.mxu0 0.0
    %205 = vmatpush1.msra.mxu0 %v150
    %206 = vmatprep.subr.mxu0 0.0
    %207 = vmatpush1.msra.mxu0 %v149
    %208 = vmatprep.subr.mxu0 0.0
    %209 = vmatpush1.msra.mxu0 %v148
    %210 = vmatprep.subr.mxu0 0.0
    %211 = vmatpush1.msra.mxu0 %v147
    %212 = vmatprep.subr.mxu0 0.0
    %213 = vmatpush1.msra.mxu0 %v146
    %214 = vmatprep.subr.mxu0 0.0
    %215 = vmatpush1.msra.mxu0 %v145
    %216 = vmatprep.subr.mxu0 0.0
    %217 = vmatpush2.msra.mxu0 %v176
    %218 = vmatprep.subr.mxu0 0.0
    %219 = vmatpush2.msra.mxu0 %v175
    %220 = vmatprep.subr.mxu0 0.0
    %221 = vmatpush2.msra.mxu0 %v174
    %222 = vmatprep.subr.mxu0 0.0
    %223 = vmatpush2.msra.mxu0 %v173
    %224 = vmatprep.subr.mxu0 0.0
    %225 = vmatpush2.msra.mxu0 %v172
    %226 = vmatprep.subr.mxu0 0.0
    %227 = vmatpush2.msra.mxu0 %v171
    %228 = vmatprep.subr.mxu0 0.0
    %229 = vmatpush2.msra.mxu0 %v170
    %230 = vmatprep.subr.mxu0 0.0
    %231 = vmatpush2.msra.mxu0 %v169
    %232 = vmatprep.subr.mxu0 0.0
    %233 = vmatpush2.msra.mxu0 %v168
    %234 = vmatprep.subr.mxu0 0.0
    %235 = vmatpush2.msra.mxu0 %v167
    %236 = vmatprep.subr.mxu0 0.0
    %237 = vmatpush2.msra.mxu0 %v166
    %238 = vmatprep.subr.mxu0 0.0
    %239 = vmatpush2.msra.mxu0 %v165
    %240 = vmatprep.subr.mxu0 0.0
    %241 = vmatpush2.msra.mxu0 %v164
    %242 = vmatprep.subr.mxu0 0.0
    %243 = vmatpush2.msra.mxu0 %v163
    %244 = vmatprep.subr.mxu0 0.0
    %245 = vmatpush2.msra.mxu0 %v162
    %246 = vmatprep.subr.mxu0 0.0
    %247 = vmatpush2.msra.mxu0 %v161
    %248 = vmatprep.mubr.f32.mxu0 %v144
    %249 = vmatmul.mubr.f32.gmra.mxu0 %v143
    %v250 = vpop.f32.mrf.mxu0
    %v251 = vadd.f32 %v182, %v250
    %v252 = vpop.f32.mrf.mxu0
    %253 = vdwg.mxu0
    %v254 = vtanh.pop %v251
    %255 = vxpose.xlu0.b32.start [1/16] %v254, 128
    %256 = vxpose.xlu0.b32.cont [2/16] 0.0, 128
    %257 = vxpose.xlu0.b32.cont [3/16] 0.0, 128
    %258 = vxpose.xlu0.b32.cont [4/16] 0.0, 128
    %259 = vxpose.xlu0.b32.cont [5/16] 0.0, 128
    %260 = vxpose.xlu0.b32.cont [6/16] 0.0, 128
    %261 = vxpose.xlu0.b32.cont [7/16] 0.0, 128
    %262 = vxpose.xlu0.b32.cont [8/16] 0.0, 128
    %263 = vxpose.xlu0.b32.cont [9/16] 0.0, 128
    %264 = vxpose.xlu0.b32.cont [10/16] 0.0, 128
    %265 = vxpose.xlu0.b32.cont [11/16] 0.0, 128
    %266 = vxpose.xlu0.b32.cont [12/16] 0.0, 128
    %267 = vxpose.xlu0.b32.cont [13/16] 0.0, 128
    %268 = vxpose.xlu0.b32.cont [14/16] 0.0, 128
    %269 = vxpose.xlu0.b32.cont [15/16] 0.0, 128
    %270 = vxpose.xlu0.b32.end [16/16] 0.0, 128
    %v271 = vpop.trf.xlu0
    %v272 = vpop.trf.xlu0
    %v273 = vpop.trf.xlu0
    %v274 = vpop.trf.xlu0
    %v275 = vpop.trf.xlu0
    %v276 = vpop.trf.xlu0
    %v277 = vpop.trf.xlu0
    %v278 = vpop.trf.xlu0
    %v279 = vpop.trf.xlu0
    %v280 = vpop.trf.xlu0
    %v281 = vpop.trf.xlu0
    %v282 = vpop.trf.xlu0
    %v283 = vpop.trf.xlu0
    %v284 = vpop.trf.xlu0
    %v285 = vpop.trf.xlu0
    %v286 = vpop.trf.xlu0
    %v287 = vld [vmem:[%s5] sm:$0xff]
    %v288 = vld [vmem:[%s5 + $0x8] sm:$0xff]
    %v289 = vld [vmem:[%s5 + $0x10] sm:$0xff]
    %v290 = vld [vmem:[%s5 + $0x18] sm:$0xff]
    %v291 = vld [vmem:[%s5 + $0x20] sm:$0xff]
    %v292 = vld [vmem:[%s5 + $0x28] sm:$0xff]
    %v293 = vld [vmem:[%s5 + $0x30] sm:$0xff]
    %v294 = vld [vmem:[%s5 + $0x38] sm:$0xff]
    %v295 = vld [vmem:[%s5 + $0x40] sm:$0xff]
    %v296 = vld [vmem:[%s5 + $0x48] sm:$0xff]
    %v297 = vld [vmem:[%s5 + $0x50] sm:$0xff]
    %v298 = vld [vmem:[%s5 + $0x58] sm:$0xff]
    %v299 = vld [vmem:[%s5 + $0x60] sm:$0xff]
    %v300 = vld [vmem:[%s5 + $0x68] sm:$0xff]
    %v301 = vld [vmem:[%s5 + $0x70] sm:$0xff]
    %v302 = vld [vmem:[%s5 + $0x78] sm:$0xff]
    %304 = vset.pattern.permute.xlu0 0
    %305 = vperm.xlu0 %304, %v287
    %v306 = vpop.permute.xlu0 %305
    %309 = vset.pattern.permute.xlu0 0
    %310 = vperm.xlu0 %309, %v288
    %v311 = vpop.permute.xlu0 %310
    %314 = vset.pattern.permute.xlu0 0
    %315 = vperm.xlu0 %314, %v289
    %v316 = vpop.permute.xlu0 %315
    %319 = vset.pattern.permute.xlu0 0
    %320 = vperm.xlu0 %319, %v290
    %v321 = vpop.permute.xlu0 %320
    %324 = vset.pattern.permute.xlu0 0
    %325 = vperm.xlu0 %324, %v291
    %v326 = vpop.permute.xlu0 %325
    %329 = vset.pattern.permute.xlu0 0
    %330 = vperm.xlu0 %329, %v292
    %v331 = vpop.permute.xlu0 %330
    %334 = vset.pattern.permute.xlu0 0
    %335 = vperm.xlu0 %334, %v293
    %v336 = vpop.permute.xlu0 %335
    %339 = vset.pattern.permute.xlu0 0
    %340 = vperm.xlu0 %339, %v294
    %v341 = vpop.permute.xlu0 %340
    %344 = vset.pattern.permute.xlu0 0
    %345 = vperm.xlu0 %344, %v295
    %v346 = vpop.permute.xlu0 %345
    %349 = vset.pattern.permute.xlu0 0
    %350 = vperm.xlu0 %349, %v296
    %v351 = vpop.permute.xlu0 %350
    %354 = vset.pattern.permute.xlu0 0
    %355 = vperm.xlu0 %354, %v297
    %v356 = vpop.permute.xlu0 %355
    %359 = vset.pattern.permute.xlu0 0
    %360 = vperm.xlu0 %359, %v298
    %v361 = vpop.permute.xlu0 %360
    %364 = vset.pattern.permute.xlu0 0
    %365 = vperm.xlu0 %364, %v299
    %v366 = vpop.permute.xlu0 %365
    %369 = vset.pattern.permute.xlu0 0
    %370 = vperm.xlu0 %369, %v300
    %v371 = vpop.permute.xlu0 %370
    %374 = vset.pattern.permute.xlu0 0
    %375 = vperm.xlu0 %374, %v301
    %v376 = vpop.permute.xlu0 %375
    %379 = vset.pattern.permute.xlu0 0
    %380 = vperm.xlu0 %379, %v302
    %v381 = vpop.permute.xlu0 %380
    %v383 = vmul.f32 %v271, %v306
    %v384 = vmul.f32 %v272, %v311
    %v385 = vmul.f32 %v273, %v316
    %v386 = vmul.f32 %v274, %v321
    %v387 = vmul.f32 %v275, %v326
    %v388 = vmul.f32 %v276, %v331
    %v389 = vmul.f32 %v277, %v336
    %v390 = vmul.f32 %v278, %v341
    %v391 = vmul.f32 %v279, %v346
    %v392 = vmul.f32 %v280, %v351
    %v393 = vmul.f32 %v281, %v356
    %v394 = vmul.f32 %v282, %v361
    %v395 = vmul.f32 %v283, %v366
    %v396 = vmul.f32 %v284, %v371
    %v397 = vmul.f32 %v285, %v376
    %v398 = vmul.f32 %v286, %v381
    %vm399 = vcmask 64512
    %v400 = vsel %vm399, %v383, 0.0
    %v401 = vsel %vm399, %v384, 0.0
    %v402 = vadd.f32 %v400, %v401
    %v403 = vsel %vm399, %v385, 0.0
    %v404 = vadd.f32 %v402, %v403
    %v405 = vsel %vm399, %v386, 0.0
    %v406 = vadd.f32 %v404, %v405
    %v407 = vsel %vm399, %v387, 0.0
    %v408 = vadd.f32 %v406, %v407
    %v409 = vsel %vm399, %v388, 0.0
    %v410 = vadd.f32 %v408, %v409
    %v411 = vsel %vm399, %v389, 0.0
    %v412 = vadd.f32 %v410, %v411
    %v413 = vsel %vm399, %v390, 0.0
    %v414 = vadd.f32 %v412, %v413
    %v415 = vsel %vm399, %v391, 0.0
    %v416 = vadd.f32 %v414, %v415
    %v417 = vsel %vm399, %v392, 0.0
    %v418 = vadd.f32 %v416, %v417
    %v419 = vsel %vm399, %v393, 0.0
    %v420 = vadd.f32 %v418, %v419
    %v421 = vsel %vm399, %v394, 0.0
    %v422 = vadd.f32 %v420, %v421
    %v423 = vsel %vm399, %v395, 0.0
    %v424 = vadd.f32 %v422, %v423
    %v425 = vsel %vm399, %v396, 0.0
    %v426 = vadd.f32 %v424, %v425
    %v427 = vsel %vm399, %v397, 0.0
    %v428 = vadd.f32 %v426, %v427
    %v429 = vsel %vm399, %v398, 0.0
    %v430 = vadd.f32 %v428, %v429
    %v431 = vrot.slane %v430, 4
    %v432 = vadd.f32 %v430, %v431
    %v433 = vrot.slane %v432, 2
    %v434 = vadd.f32 %v432, %v433
    %v435 = vrot.slane %v434, 1
    %v436 = vadd.f32 %v434, %v435
    %s437 = sld [smem:[#allocation2]]
    %v438 = vstv %s437
    %v439 = vadd.f32 %v436, %v438
    %vm440 = vcmask 57344
    %441 = vst.msk [vmem:[#allocation6] sm:$0x1] %vm440, %v439
    // Predicated region
    $region34: #{tpu_custom_call.1} parent=1 // pred_check
      _
    $region35: #{tpu_custom_call.1} parent=1 // pred_check_branch
      %443 = sbr.rel (0) target = $region37
    $region36: #{tpu_custom_call.1} parent=1 // pred_region
      %s445 = ssub.s32 16, 16
      %446 = vsyncadd [#allocation5], %s445
      %s448 = sshll.u32 [#allocation6], 4
      %s449 = int_to_ptr.vmem [resolvable:$true] %s448
      %451 = dma.vmem_to_hbm [thread:$0]  %s449, 16, %s7, [#allocation5]
    $region37: #{tpu_custom_call.1} parent=1 // pred_fallthru
      _
    // Predicated region
    $region38: #{tpu_custom_call.1} parent=1 // pred_check
      _
    $region39: #{tpu_custom_call.1} parent=1 // pred_check_branch
      %453 = sbr.rel (0) target = $region41
    $region40: #{tpu_custom_call.1} parent=1 // pred_region
      %454 = dma.done [#allocation5], 16
    $region41: #{tpu_custom_call.1} parent=1 // pred_fallthru
      _
    %455 = vsyncpa [#allocation4], 1
    %456 = vsyncpa [#allocation5], 1

</llo_original>
